<compile_context>
chip_gen: v7x
topology: tpu7x:2x2x1
jax: 0.10.0
libtpu: 0.0.40
codegen_flags: <defaults>
</compile_context>

<pallas_src>
import functools

import jax
import jax.numpy as jnp
from jax import lax
from jax.experimental import pallas as pl
from jax.experimental.pallas import tpu as pltpu


def _round_up(x, m):
    return (x + m - 1) // m * m


def _sum_integer_powers(base, exponents):
    """sum(base**e for e in exponents) via shared repeated squaring (VPU only)."""
    cache = {1: base}

    def power(n):
        if n in cache:
            return cache[n]
        val = power(n // 2)
        val = val * val
        if n % 2:
            val = val * base
        cache[n] = val
        return val

    total = None
    for e in exponents:
        p = power(int(e))
        total = p if total is None else total + p
    return total


def _sigma_groups(sigmas, s_ref, tol=1e-6, max_exp=64):
    """Group sigmas into ladders: each group costs one exp; members whose
    ratio to the group base is a small integer come from repeated squaring.
    Returns a tuple of (multiplier relative to s_ref, exponents)."""
    groups = []  # [(base_sigma, [exponents])]
    for s in sorted(sigmas, reverse=True):  # largest first -> bases first
        placed = False
        for base, exps in groups:
            r = base / s
            ri = int(round(r))
            if 1 <= ri <= max_exp and abs(r - ri) <= tol * r:
                exps.append(ri)
                placed = True
                break
        if not placed:
            groups.append((s, [1]))
    return tuple((s_ref / base, tuple(exps)) for base, exps in groups)


def _mmd_tile_kernel(a_ref, bt_ref, out_ref, *, tile, blocks_per_domain, groups):
    i = pl.program_id(0)
    j = pl.program_id(1)

    # Per-row-block accumulator lives in the (8, tile) output block; init it
    # at the start of every inner j sweep.
    @pl.when(j == 0)
    def _init():
        out_ref[...] = jnp.zeros_like(out_ref)

    # Canonical (tile, feat) @ (feat, tile) MXU contraction.  The -1/sigma_ref
    # scale is pre-folded into bt, so this is already -||x_i - x_j||^2/s_ref.
    d2s = lax.dot_general(
        a_ref[...], bt_ref[...],
        dimension_numbers=(((1,), (0,)), ((), ())),
        preferred_element_type=jnp.float32)
    # True squared distance is >= 0 => scaled value must be <= 0.  Clamp small
    # positives caused by cancellation in the gram identity.
    d2s = jnp.minimum(d2s, 0.0)

    # Multi-bandwidth Gaussian kernel: one exp (EUP) per sigma group, the
    # remaining bandwidths inside a group come from repeated squaring (VPU).
    k = None
    for mult, exponents in groups:
        e_arg = d2s if mult == 1.0 else d2s * jnp.float32(mult)
        base = jnp.exp(e_arg)
        term = _sum_integer_powers(base, exponents)
        k = term if k is None else k + term

    # +-1 block sign is a scalar function of the grid position (tiles never
    # straddle the source/target boundary because they divide the padded batch).
    same_domain = (i < blocks_per_domain) == (j < blocks_per_domain)
    sign = jnp.where(same_domain, jnp.float32(1.0), jnp.float32(-1.0))

    # Deferred sublane reduce: fold the tile rows into an (8, tile) partial via
    # tile-aligned static slices + VPU adds (no XLU rotate-reduce, no masked
    # 1-sublane accumulator).  The final 8->1 / lane reduce is done in JAX.
    partial = k[0:8, :]
    for r in range(1, tile // 8):
        partial = partial + k[8 * r:8 * (r + 1), :]

    out_ref[...] += sign * partial


def mmd_loss(source, target, fix_sigma, *, block_size=512):
    """Pallas TPU implementation of MMD_loss(fix_sigma).forward(source, target).

    block_size: edge of the square distance tiles (multiple of 128).  512 is a
    good default on all generations; v6e (128 MiB VMEM) can use 1024 (the
    wrapper raises vmem_limit_bytes automatically); keep <=512 on v7x (64 MiB
    physical / 32 MiB scoped VMEM) and v5e (16 MiB default scoped).
    """
    assert source.ndim == 2 and source.shape == target.shape
    assert block_size % 128 == 0
    sigmas = tuple(float(s) for s in fix_sigma)
    assert len(sigmas) > 0

    b, d = source.shape

    # Tile edge: multiple of 128 (lane-dense rhs / output), <= block_size,
    # divides the padded per-domain batch.
    tile = min(block_size, _round_up(b, 128))
    b_pad = _round_up(b, tile)

    # Keep everything f32: the matmul (K = d + 2) is nowhere near the binding
    # unit here, and bf16 operands would lose precision in the gram identity.
    feat = d + 2
    feat_pad = _round_up(feat, 8)

    # Reference bandwidth folded into the rhs operand: a . bt = -d2 / s_ref.
    s_ref = max(sigmas)
    neg_inv_ref = -1.0 / s_ref

    def _augment(x):
        x = x.astype(jnp.float32)
        sq = jnp.sum(x * x, axis=1, keepdims=True)            # row norms, hoisted
        pad = b_pad - b
        x = jnp.pad(x, ((0, pad), (0, 0)))
        # Padded rows get a huge squared norm so exp() underflows to exactly 0.
        sq = jnp.pad(sq, ((0, pad), (0, 0)), constant_values=1e30)
        ones = jnp.ones((b_pad, 1), jnp.float32)
        zcols = jnp.zeros((b_pad, feat_pad - feat), jnp.float32)
        # a_i . bt_j = (-2 x_i.x_j + ||x_i||^2 + ||x_j||^2) * (-1/s_ref)
        a = jnp.concatenate([x, sq, ones, zcols], axis=1)
        bm = jnp.concatenate([-2.0 * x, ones, sq, zcols], axis=1) * neg_inv_ref
        return a, bm

    a_src, b_src = _augment(source)
    a_tgt, b_tgt = _augment(target)
    a = jnp.concatenate([a_src, a_tgt], axis=0)               # (2*b_pad, feat_pad)
    bt = jnp.concatenate([b_src, b_tgt], axis=0).T            # (feat_pad, 2*b_pad)

    blocks_per_domain = b_pad // tile
    n_blocks = 2 * blocks_per_domain
    grid = (n_blocks, n_blocks)

    groups = _sigma_groups(sigmas, s_ref)

    kernel = functools.partial(
        _mmd_tile_kernel,
        tile=tile,
        blocks_per_domain=blocks_per_domain,
        groups=groups,
    )

    out = pl.pallas_call(
        kernel,
        out_shape=jax.ShapeDtypeStruct((n_blocks * 8, tile), jnp.float32),
        grid_spec=pltpu.PrefetchScalarGridSpec(
            num_scalar_prefetch=0,
            grid=grid,
            in_specs=[
                # Row tile: same block over the whole inner j sweep -> stays
                # resident in VMEM; only the column tile is re-DMA'd per step.
                pl.BlockSpec((tile, feat_pad), lambda i, j: (i, 0)),
                # Pre-transposed rhs: tile dimension on the dense lane axis.
                pl.BlockSpec((feat_pad, tile), lambda i, j: (0, j)),
            ],
            out_specs=pl.BlockSpec((8, tile), lambda i, j: (i, 0)),
        ),
        compiler_params=pltpu.CompilerParams(
            # Per-row-block outputs make the i axis independent -> shard it
            # across the v7x TensorCores; j is the (resident) reduction axis.
            dimension_semantics=("parallel", "arbitrary"),
            vmem_limit_bytes=(64 * 1024 * 1024 if tile >= 1024 else None)),
    )(a, bt)

    # Final 8->1 sublane reduce, lane reduce and 1/b^2 scale in the epilogue.
    return jnp.sum(out) * jnp.float32(1.0 / (b * b))


def _mmd_loss_ref(source, target, fix_sigma):
    """Pure-JAX reference mirroring the PyTorch forward exactly."""
    batch_size = source.shape[0]
    total = jnp.concatenate([source, target], axis=0).astype(jnp.float32)
    diff = total[None, :, :] - total[:, None, :]
    l2 = jnp.sum(diff * diff, axis=2)
    k = sum(jnp.exp(-l2 / s) for s in fix_sigma)
    xx = k[:batch_size, :batch_size]
    yy = k[batch_size:, batch_size:]
    xy = k[:batch_size, batch_size:]
    yx = k[batch_size:, :batch_size]
    return jnp.mean(xx + yy - xy - yx)


if __name__ == "__main__":
    key = jax.random.PRNGKey(0)

    # Case 1: geometric sigma ladder (single exp for all bandwidths).
    ks, kt = jax.random.split(key)
    source = jax.random.normal(ks, (8, 32), dtype=jnp.float32)
    target = jax.random.normal(kt, (8, 32), dtype=jnp.float32) + 0.5
    sigmas = [1.0, 2.0, 4.0, 8.0]
    loss = jax.block_until_ready(mmd_loss(source, target, sigmas))
    ref = jax.block_until_ready(_mmd_loss_ref(source, target, sigmas))
    assert jnp.allclose(loss, ref, rtol=1e-4, atol=1e-4), (loss, ref)

    # Case 2: non-integer sigma ratios (multi-group exp path) + row padding.
    ks2, kt2 = jax.random.split(jax.random.PRNGKey(1), 2)
    source2 = jax.random.normal(ks2, (6, 20), dtype=jnp.float32) * 1.3
    target2 = jax.random.normal(kt2, (6, 20), dtype=jnp.float32) - 0.25
    sigmas2 = [0.7, 1.9, 5.3]
    loss2 = jax.block_until_ready(mmd_loss(source2, target2, sigmas2))
    ref2 = jax.block_until_ready(_mmd_loss_ref(source2, target2, sigmas2))
    assert jnp.allclose(loss2, ref2, rtol=1e-4, atol=1e-4), (loss2, ref2)

    print("KERNEL_OK")
</pallas_src>

<mosaic_0001>
module attributes {stable_mosaic.version = 11 : i64} {
  func.func @_mmd_tile_kernel(%arg0: i32, %arg1: i32, %arg2: memref<128x40xf32, #tpu.memory_space<vmem>>, %arg3: memref<40x128xf32, #tpu.memory_space<vmem>>, %arg4: memref<8x128xf32, #tpu.memory_space<vmem>>) attributes {dimension_semantics = [#tpu.dimension_semantics<parallel>, #tpu.dimension_semantics<arbitrary>], iteration_bounds = array<i64: 2, 2>, scalar_prefetch = 0 : i64, scratch_operands = 0 : i64, tpu.core_type = #tpu.core_type<tc>, window_params = [{transform_indices = @transform_0, window_bounds = array<i64: 128, 40>}, {transform_indices = @transform_1, window_bounds = array<i64: 40, 128>}, {transform_indices = @transform_2, window_bounds = array<i64: 8, 128>}]} {
    %c0_i32 = arith.constant 0 : i32
    %0 = arith.cmpi eq, %arg1, %c0_i32 : i32
    %1 = arith.extui %0 : i1 to i32
    %c0_i32_0 = arith.constant 0 : i32
    %2 = arith.cmpi ne, %1, %c0_i32_0 : i32
    scf.if %2 {
      %cst_12 = arith.constant 0.000000e+00 : f32
      %56 = vector.broadcast %cst_12 : f32 to vector<8x128xf32>
      %c0_13 = arith.constant 0 : index
      %c0_14 = arith.constant 0 : index
      %57 = vector.load %arg4[%c0_13, %c0_14] : memref<8x128xf32, #tpu.memory_space<vmem>>, vector<8x128xf32>
      tpu.vector_store %arg4[%c0_13, %c0_14], %56 {strides = array<i32>} : memref<8x128xf32, #tpu.memory_space<vmem>>, vector<8x128xf32>,
    } else {
    }
    %c0 = arith.constant 0 : index
    %c0_1 = arith.constant 0 : index
    %3 = vector.load %arg2[%c0, %c0_1] : memref<128x40xf32, #tpu.memory_space<vmem>>, vector<128x40xf32>
    %c0_2 = arith.constant 0 : index
    %c0_3 = arith.constant 0 : index
    %4 = vector.load %arg3[%c0_2, %c0_3] : memref<40x128xf32, #tpu.memory_space<vmem>>, vector<40x128xf32>
    %cst = arith.constant dense<0.000000e+00> : vector<128x128xf32>
    %5 = tpu.matmul %3, %4, %cst {dimension_numbers = #tpu.dot_dimension_numbers<[1], [0], [0], [1], [0, 0, 1, 1], [], []>} : vector<128x40xf32>, vector<40x128xf32>, vector<128x128xf32> -> vector<128x128xf32>
    %cst_4 = arith.constant 0.000000e+00 : f32
    %6 = vector.broadcast %cst_4 : f32 to vector<128x128xf32>
    %7 = arith.minimumf %5, %6 : vector<128x128xf32>
    %8 = math.exp %7 : vector<128x128xf32>
    %9 = arith.mulf %8, %8 : vector<128x128xf32>
    %10 = arith.addf %8, %9 : vector<128x128xf32>
    %11 = arith.mulf %9, %9 : vector<128x128xf32>
    %12 = arith.addf %10, %11 : vector<128x128xf32>
    %13 = arith.mulf %11, %11 : vector<128x128xf32>
    %14 = arith.addf %12, %13 : vector<128x128xf32>
    %c1_i32 = arith.constant 1 : i32
    %15 = arith.cmpi slt, %arg0, %c1_i32 : i32
    %c1_i32_5 = arith.constant 1 : i32
    %16 = arith.cmpi slt, %arg1, %c1_i32_5 : i32
    %17 = arith.xori %15, %16 : i1
    %true = arith.constant true
    %18 = arith.xori %17, %true : i1
    %cst_6 = arith.constant 1.000000e+00 : f32
    %cst_7 = arith.constant -1.000000e+00 : f32
    %19 = arith.select %18, %cst_6, %cst_7 : f32
    %20 = vector.extract_strided_slice %14 {offsets = [0, 0], sizes = [8, 128], strides = [1, 1]} : vector<128x128xf32> to vector<8x128xf32>
    %21 = vector.extract_strided_slice %14 {offsets = [8, 0], sizes = [8, 128], strides = [1, 1]} : vector<128x128xf32> to vector<8x128xf32>
    %22 = arith.addf %20, %21 : vector<8x128xf32>
    %23 = vector.extract_strided_slice %14 {offsets = [16, 0], sizes = [8, 128], strides = [1, 1]} : vector<128x128xf32> to vector<8x128xf32>
    %24 = arith.addf %22, %23 : vector<8x128xf32>
    %25 = vector.extract_strided_slice %14 {offsets = [24, 0], sizes = [8, 128], strides = [1, 1]} : vector<128x128xf32> to vector<8x128xf32>
    %26 = arith.addf %24, %25 : vector<8x128xf32>
    %27 = vector.extract_strided_slice %14 {offsets = [32, 0], sizes = [8, 128], strides = [1, 1]} : vector<128x128xf32> to vector<8x128xf32>
    %28 = arith.addf %26, %27 : vector<8x128xf32>
    %29 = vector.extract_strided_slice %14 {offsets = [40, 0], sizes = [8, 128], strides = [1, 1]} : vector<128x128xf32> to vector<8x128xf32>
    %30 = arith.addf %28, %29 : vector<8x128xf32>
    %31 = vector.extract_strided_slice %14 {offsets = [48, 0], sizes = [8, 128], strides = [1, 1]} : vector<128x128xf32> to vector<8x128xf32>
    %32 = arith.addf %30, %31 : vector<8x128xf32>
    %33 = vector.extract_strided_slice %14 {offsets = [56, 0], sizes = [8, 128], strides = [1, 1]} : vector<128x128xf32> to vector<8x128xf32>
    %34 = arith.addf %32, %33 : vector<8x128xf32>
    %35 = vector.extract_strided_slice %14 {offsets = [64, 0], sizes = [8, 128], strides = [1, 1]} : vector<128x128xf32> to vector<8x128xf32>
    %36 = arith.addf %34, %35 : vector<8x128xf32>
    %37 = vector.extract_strided_slice %14 {offsets = [72, 0], sizes = [8, 128], strides = [1, 1]} : vector<128x128xf32> to vector<8x128xf32>
    %38 = arith.addf %36, %37 : vector<8x128xf32>
    %39 = vector.extract_strided_slice %14 {offsets = [80, 0], sizes = [8, 128], strides = [1, 1]} : vector<128x128xf32> to vector<8x128xf32>
    %40 = arith.addf %38, %39 : vector<8x128xf32>
    %41 = vector.extract_strided_slice %14 {offsets = [88, 0], sizes = [8, 128], strides = [1, 1]} : vector<128x128xf32> to vector<8x128xf32>
    %42 = arith.addf %40, %41 : vector<8x128xf32>
    %43 = vector.extract_strided_slice %14 {offsets = [96, 0], sizes = [8, 128], strides = [1, 1]} : vector<128x128xf32> to vector<8x128xf32>
    %44 = arith.addf %42, %43 : vector<8x128xf32>
    %45 = vector.extract_strided_slice %14 {offsets = [104, 0], sizes = [8, 128], strides = [1, 1]} : vector<128x128xf32> to vector<8x128xf32>
    %46 = arith.addf %44, %45 : vector<8x128xf32>
    %47 = vector.extract_strided_slice %14 {offsets = [112, 0], sizes = [8, 128], strides = [1, 1]} : vector<128x128xf32> to vector<8x128xf32>
    %48 = arith.addf %46, %47 : vector<8x128xf32>
    %49 = vector.extract_strided_slice %14 {offsets = [120, 0], sizes = [8, 128], strides = [1, 1]} : vector<128x128xf32> to vector<8x128xf32>
    %50 = arith.addf %48, %49 : vector<8x128xf32>
    %c0_8 = arith.constant 0 : index
    %c0_9 = arith.constant 0 : index
    %51 = vector.load %arg4[%c0_8, %c0_9] : memref<8x128xf32, #tpu.memory_space<vmem>>, vector<8x128xf32>
    %52 = vector.broadcast %19 : f32 to vector<8x128xf32>
    %53 = arith.mulf %52, %50 : vector<8x128xf32>
    %54 = arith.addf %51, %53 : vector<8x128xf32>
    %c0_10 = arith.constant 0 : index
    %c0_11 = arith.constant 0 : index
    %55 = vector.load %arg4[%c0_10, %c0_11] : memref<8x128xf32, #tpu.memory_space<vmem>>, vector<8x128xf32>
    tpu.vector_store %arg4[%c0_10, %c0_11], %54 {strides = array<i32>} : memref<8x128xf32, #tpu.memory_space<vmem>>, vector<8x128xf32>,
    return
  }
  func.func @transform_0(%arg0: i32, %arg1: i32) -> (i32, i32) {
    %c0_i32 = arith.constant 0 : i32
    %c0_i32_0 = arith.constant 0 : i32
    return %arg0, %c0_i32 : i32, i32
  }
  func.func @transform_1(%arg0: i32, %arg1: i32) -> (i32, i32) {
    %c0_i32 = arith.constant 0 : i32
    %c0_i32_0 = arith.constant 0 : i32
    return %c0_i32, %arg1 : i32, i32
  }
  func.func @transform_2(%arg0: i32, %arg1: i32) -> (i32, i32) {
    %c0_i32 = arith.constant 0 : i32
    %c0_i32_0 = arith.constant 0 : i32
    return %arg0, %c0_i32 : i32, i32
  }
}

</mosaic_0001>

<llo_original>
// kernel: tpu_custom_call.1
$region0: #{tpu_custom_call.1}
  #allocation0 [shape = 'u32[]', space=smem, size = 0x4, offset = 0x4, fixed_abs, tag = 'smem constant byte address 0x4 - core index']
  #allocation1 [shape = 'u32[144,128]{1,0:T(1,128)}', space=vmem, size = 0x12000, scoped, tag = 'internal scratch']
  %s0 = inlined_call_operand.vmem [shape: f32[256,40], index: 0, kind: input, shape index: {}]
  %s1 = inlined_call_operand.vmem [shape: f32[40,256], index: 1, kind: input, shape index: {}]
  %s2 = inlined_call_operand.hbm [shape: f32[16,128], index: 2, kind: output, shape index: {}]
  %s3 = sld [smem:[#allocation0]]
  $region83: #{tpu_custom_call.1} parent=0
    _
  %s5 = ssub.s32 1, %s3
  %s6 = scalar_select 0, %s5, %s3
  $region1: #{tpu_custom_call.1} parent=0
    #allocation2 [shape = 'u8[40960]{0}', space=vmem, size = 0xa000, scoped, tag = 'input window, operand 1']
    #allocation3 [shape = 'u8[8192]{0}', space=vmem, size = 0x2000, scoped, tag = 'output window, operand 0']
    #allocation4 [shape = 's32[2]{0}', space=sflag, size = 0x8, scoped, tag = 'scoped memory for tpu_custom_call.1']
    %7 = vsyncpa [#allocation4], 0
    %s8 = scalar_lea.sflag [#allocation4], 1
    %9 = vsyncpa %s8, 0
    loop: start=0, step=1, limit=6
    $region2: #{tpu_custom_call.1} parent=1 // loop_pre_header
      _
    $region3: #{tpu_custom_call.1} parent=1 // loop_header
      %s11 = sphi 0, %s15
      %p12 = scmp.ge.s32.totalorder %s11, 6
      %s18 = sphi 0, %s30
      %s19 = sphi 0, %s26
      %s20 = sphi 0, %s18
      %s21 = sphi 0, %s19
      %s22 = sphi 0, %s20
      %s23 = sphi 0, %s21
      %s33 = sphi 0, %s35
      %s36 = sphi 0, %s33
      %s37 = sphi 0, %s36
      %s53 = sphi 0, %s37
      %s59 = sphi 0, %s61
      %s62 = sphi 0, %s59
      %s63 = sphi 0, %s62
      %s79 = sphi 0, %s63
      %s85 = sphi 0, %s87
      %s88 = sphi 0, %s85
      %s89 = sphi 0, %s88
      %s105 = sphi 0, %s89
    $region4: #{tpu_custom_call.1} parent=1 // loop_header_branch
      %14 = sbr.rel (%p12) target = $region8
    $region5: #{tpu_custom_call.1} parent=1 // loop_body
      %s16 = ssub.s32 %s11, 1
      %s17 = ssub.s32 %s11, 2
      %s24 = sadd.s32 1, %s19
      %p25 = scmp.ge.s32.totalorder %s24, 2
      %s26 = scalar_select %p25, 0, %s24
      %s27 = sadd.s32 1, %s18
      %s28 = scalar_select %p25, %s27, %s18
      %p29 = scmp.ge.s32.totalorder %s28, 2
      %s30 = scalar_select %p29, 0, %s28
      %s31 = ssub.s32 %s18, %s30
      %p32 = scmp.eq.s32.totalorder %s31, 0
      %s34 = sadd.s32 %s33, 1
      %s35 = scalar_select %p32, %s33, %s34
      %p38 = pneg %p32
      %p39 = scmp.eq.s32.totalorder %s11, 3
      %p40 = por %p38, %p39
      %p41 = scmp.ne.s32.totalorder %s33, %s36
      %p42 = scmp.eq.s32.totalorder %s11, 0
      %p43 = por %p41, %p42
      %p44 = scmp.ne.s32.totalorder %s33, %s36
      %p45 = scmp.eq.s32.totalorder %s16, 3
      %p46 = por %p44, %p45
      %p47 = scmp.ne.s32.totalorder %s36, %s37
      %p48 = scmp.eq.s32.totalorder %s16, 0
      %p49 = por %p47, %p48
      %p50 = scmp.ne.s32.totalorder %s36, %s37
      %p51 = scmp.eq.s32.totalorder %s17, 3
      %p52 = por %p50, %p51
      %p54 = scmp.ne.s32.totalorder %s37, %s53
      %p55 = scmp.eq.s32.totalorder %s17, 0
      %p56 = por %p54, %p55
      %s57 = ssub.s32 %s19, %s26
      %p58 = scmp.eq.s32.totalorder %s57, 0
      %s60 = sadd.s32 %s59, 1
      %s61 = scalar_select %p58, %s59, %s60
      %p64 = pneg %p58
      %p65 = scmp.eq.s32.totalorder %s11, 3
      %p66 = por %p64, %p65
      %p67 = scmp.ne.s32.totalorder %s59, %s62
      %p68 = scmp.eq.s32.totalorder %s11, 0
      %p69 = por %p67, %p68
      %p70 = scmp.ne.s32.totalorder %s59, %s62
      %p71 = scmp.eq.s32.totalorder %s16, 3
      %p72 = por %p70, %p71
      %p73 = scmp.ne.s32.totalorder %s62, %s63
      %p74 = scmp.eq.s32.totalorder %s16, 0
      %p75 = por %p73, %p74
      %p76 = scmp.ne.s32.totalorder %s62, %s63
      %p77 = scmp.eq.s32.totalorder %s17, 3
      %p78 = por %p76, %p77
      %p80 = scmp.ne.s32.totalorder %s63, %s79
      %p81 = scmp.eq.s32.totalorder %s17, 0
      %p82 = por %p80, %p81
      %s83 = ssub.s32 %s18, %s30
      %p84 = scmp.eq.s32.totalorder %s83, 0
      %s86 = sadd.s32 %s85, 1
      %s87 = scalar_select %p84, %s85, %s86
      %p90 = pneg %p84
      %p91 = scmp.eq.s32.totalorder %s11, 3
      %p92 = por %p90, %p91
      %p93 = scmp.ne.s32.totalorder %s85, %s88
      %p94 = scmp.eq.s32.totalorder %s11, 0
      %p95 = por %p93, %p94
      %p96 = scmp.ne.s32.totalorder %s85, %s88
      %p97 = scmp.eq.s32.totalorder %s16, 3
      %p98 = por %p96, %p97
      %p99 = scmp.ne.s32.totalorder %s88, %s89
      %p100 = scmp.eq.s32.totalorder %s16, 0
      %p101 = por %p99, %p100
      %p102 = scmp.ne.s32.totalorder %s88, %s89
      %p103 = scmp.eq.s32.totalorder %s17, 3
      %p104 = por %p102, %p103
      %p106 = scmp.ne.s32.totalorder %s89, %s105
      %p107 = scmp.eq.s32.totalorder %s17, 0
      %p108 = por %p106, %p107
      %p109 = scmp.le.s32.totalorder 1, %s11
      %p110 = scmp.lt.s32.totalorder %s11, 5
      %p111 = pnand %p109, %p110
      %p112 = pneg %p111
      // Predicated region
      $region9: #{tpu_custom_call.1} parent=5 // pred_check
        _
      $region10: #{tpu_custom_call.1} parent=5 // pred_check_branch
        %114 = sbr.rel (%p111) target = $region12
      $region11: #{tpu_custom_call.1} parent=5 // pred_region
        %s115 = ssub.s32 %s11, 1
      $region12: #{tpu_custom_call.1} parent=5 // pred_fallthru
        _
      %p116 = scmp.lt.s32.totalorder %s11, 4
      // Predicated region
      $region13: #{tpu_custom_call.1} parent=5 // pred_check
        %p117 = pneg %p116
      $region14: #{tpu_custom_call.1} parent=5 // pred_check_branch
        %119 = sbr.rel (%p117) target = $region16
      $region15: #{tpu_custom_call.1} parent=5 // pred_region
        // Predicated region
        $region17: #{tpu_custom_call.1} parent=15 // pred_check
          %p120 = pneg %p43
        $region18: #{tpu_custom_call.1} parent=15 // pred_check_branch
          %122 = sbr.rel (%p120) target = $region20
        $region19: #{tpu_custom_call.1} parent=15 // pred_region
          %s123 = smul.u32 16, %s18
          %p124 = scmp.lt.s32.totalorder %s123, 31
          %s125 = scalar_select %p124, %s123, 31
          %s126 = smul.addr %s125, 8
          %s127 = scalar_lea.vmem %s0, %s126
          %s128 = smul.u32 16, %s18
        $region20: #{tpu_custom_call.1} parent=15 // pred_fallthru
          _
        // Predicated region
        $region21: #{tpu_custom_call.1} parent=15 // pred_check
          %p129 = pneg %p69
        $region22: #{tpu_custom_call.1} parent=15 // pred_check_branch
          %131 = sbr.rel (%p129) target = $region24
        $region23: #{tpu_custom_call.1} parent=15 // pred_region
          %s132 = sand.u32 %s59, 1
          %s133 = sand.u32 %s59, 1
          %s134 = smul.addr %s133, 40
          %s135 = scalar_lea.vmem [#allocation2], %s134
          %s136 = smul.addr %s19, 8
          %s137 = scalar_lea.vmem %s1, %s136
          // Predicated region
          $region25: #{tpu_custom_call.1} parent=23 // pred_check
            _
          $region26: #{tpu_custom_call.1} parent=23 // pred_check_branch
            %139 = sbr.rel (0) target = $region28
          $region27: #{tpu_custom_call.1} parent=23 // pred_region
            // Predicated region
            $region29: #{tpu_custom_call.1} parent=27 // pred_check
              _
            $region30: #{tpu_custom_call.1} parent=27 // pred_check_branch
              %141 = sbr.rel (0) target = $region32
            $region31: #{tpu_custom_call.1} parent=27 // pred_region
              // Predicated region
              $region44: #{tpu_custom_call.1} parent=31 // pred_check
                _
              $region45: #{tpu_custom_call.1} parent=31 // pred_check_branch
                %164 = sbr.rel (0) target = $region47
              $region46: #{tpu_custom_call.1} parent=31 // pred_region
                loop: start=0, step=1, limit=1
                $region48: #{tpu_custom_call.1} parent=46 // loop_pre_header
                  _
                $region49: #{tpu_custom_call.1} parent=46 // loop_header
                  %s166 = sphi 0, %s170
                  %p167 = scmp.ge.s32.totalorder %s166, 1
                  %s171 = sphi %s137, %s137
                  %s172 = sphi %s135, %s135
                $region50: #{tpu_custom_call.1} parent=46 // loop_header_branch
                  %169 = sbr.rel (%p167) target = $region54
                $region51: #{tpu_custom_call.1} parent=46 // loop_body
                  %v173 = vld [vmem:[%s171] sm:$0xff]
                  %174 = vst [vmem:[%s172] sm:$0xff] %v173
                  %v175 = vld [vmem:[%s171 + $0x10] sm:$0xff]
                  %176 = vst [vmem:[%s172 + $0x8] sm:$0xff] %v175
                  %v177 = vld [vmem:[%s171 + $0x20] sm:$0xff]
                  %178 = vst [vmem:[%s172 + $0x10] sm:$0xff] %v177
                  %v179 = vld [vmem:[%s171 + $0x30] sm:$0xff]
                  %180 = vst [vmem:[%s172 + $0x18] sm:$0xff] %v179
                  %v181 = vld [vmem:[%s171 + $0x40] sm:$0xff]
                  %182 = vst [vmem:[%s172 + $0x20] sm:$0xff] %v181
                $region52: #{tpu_custom_call.1} parent=46 // loop_footer
                  %s170 = sadd.s32 1, %s166
                $region53: #{tpu_custom_call.1} parent=46 // loop_footer_branch
                  %165 = sbr.rel target = $region49
                $region54: #{tpu_custom_call.1} parent=46 // loop_exit
                  _
              $region47: #{tpu_custom_call.1} parent=31 // pred_fallthru
                _
              // Predicated region
              $region55: #{tpu_custom_call.1} parent=31 // pred_check
                _
              $region56: #{tpu_custom_call.1} parent=31 // pred_check_branch
                %184 = sbr.rel target = $region58
              $region57: #{tpu_custom_call.1} parent=31 // pred_region
                _
              $region58: #{tpu_custom_call.1} parent=31 // pred_fallthru
                _
            $region32: #{tpu_custom_call.1} parent=27 // pred_fallthru
              _
            // Predicated region
            $region33: #{tpu_custom_call.1} parent=27 // pred_check
              _
            $region34: #{tpu_custom_call.1} parent=27 // pred_check_branch
              %143 = sbr.rel target = $region36
            $region35: #{tpu_custom_call.1} parent=27 // pred_region
              loop: start=0, step=1, limit=1
              $region37: #{tpu_custom_call.1} parent=35 // loop_pre_header
                _
              $region38: #{tpu_custom_call.1} parent=35 // loop_header
                %s146 = sphi 0, %s150
                %p147 = scmp.ge.s32.totalorder %s146, 1
                %s151 = sphi %s137, %s137
                %s152 = sphi %s135, %s135
              $region39: #{tpu_custom_call.1} parent=35 // loop_header_branch
                %149 = sbr.rel (%p147) target = $region43
              $region40: #{tpu_custom_call.1} parent=35 // loop_body
                %v153 = vld [vmem:[%s151] sm:$0xff]
                %154 = vst [vmem:[%s152] sm:$0xff] %v153
                %v155 = vld [vmem:[%s151 + $0x10] sm:$0xff]
                %156 = vst [vmem:[%s152 + $0x8] sm:$0xff] %v155
                %v157 = vld [vmem:[%s151 + $0x20] sm:$0xff]
                %158 = vst [vmem:[%s152 + $0x10] sm:$0xff] %v157
                %v159 = vld [vmem:[%s151 + $0x30] sm:$0xff]
                %160 = vst [vmem:[%s152 + $0x18] sm:$0xff] %v159
                %v161 = vld [vmem:[%s151 + $0x40] sm:$0xff]
                %162 = vst [vmem:[%s152 + $0x20] sm:$0xff] %v161
              $region41: #{tpu_custom_call.1} parent=35 // loop_footer
                %s150 = sadd.s32 1, %s146
              $region42: #{tpu_custom_call.1} parent=35 // loop_footer_branch
                %145 = sbr.rel target = $region38
              $region43: #{tpu_custom_call.1} parent=35 // loop_exit
                _
            $region36: #{tpu_custom_call.1} parent=27 // pred_fallthru
              _
          $region28: #{tpu_custom_call.1} parent=23 // pred_fallthru
            _
          %185 = vnop
        $region24: #{tpu_custom_call.1} parent=15 // pred_fallthru
          _
      $region16: #{tpu_custom_call.1} parent=5 // pred_fallthru
        _
      %p186 = scmp.le.s32.totalorder 1, %s11
      %p187 = scmp.lt.s32.totalorder %s11, 5
      %p188 = pnand %p186, %p187
      %p189 = pneg %p188
      // Predicated region
      $region59: #{tpu_custom_call.1} parent=5 // pred_check
        _
      $region60: #{tpu_custom_call.1} parent=5 // pred_check_branch
        %191 = sbr.rel (%p188) target = $region62
      $region61: #{tpu_custom_call.1} parent=5 // pred_region
        %s192 = ssub.s32 %s11, 1
        %s193 = sand.u32 %s62, 1
        %s194 = sand.u32 %s62, 1
        %s195 = smul.addr %s194, 40
        %s196 = scalar_lea.vmem [#allocation2], %s195
        // Predicated region
        $region63: #{tpu_custom_call.1} parent=61 // pred_check
          %p197 = pneg %p75
        $region64: #{tpu_custom_call.1} parent=61 // pred_check_branch
          %199 = sbr.rel (%p197) target = $region66
        $region65: #{tpu_custom_call.1} parent=61 // pred_region
          _
        $region66: #{tpu_custom_call.1} parent=61 // pred_fallthru
          _
        %s200 = smul.u32 16, %s20
        %p201 = scmp.lt.s32.totalorder %s200, 31
        %s202 = scalar_select %p201, %s200, 31
        %s203 = smul.addr %s202, 8
        %s204 = scalar_lea.vmem %s0, %s203
        %p205 = pneg %p49
        %p206 = pneg %p46
        %s207 = sand.u32 %s62, 1
        %s208 = sand.u32 %s62, 1
        %s209 = smul.addr %s208, 40
        %s210 = scalar_lea.vmem [#allocation2], %s209
        %p211 = pneg %p75
        %p212 = pneg %p72
        %p213 = pneg %p101
        %p214 = pneg %p98
        %s215 = sand.u32 %s88, 1
        %s216 = scalar_lea.sflag [#allocation4], %s215
        %s217 = sand.u32 %s88, 1
        %s218 = smul.addr %s217, 8
        %s219 = scalar_lea.vmem [#allocation3], %s218
        %s220 = smul.u32 16, %s20
        %p221 = scmp.lt.s32.totalorder %s220, 31
        %s222 = scalar_select %p221, %s220, 31
        %s223 = smul.addr %s222, 8
        %s224 = scalar_lea.vmem %s0, %s223
        %s225 = smul.u32 16, %s20
        %p226 = scmp.eq.s32.totalorder %s21, 0
        // Predicated region
        $region67: #{tpu_custom_call.1} parent=61 // pred_check
          %p227 = pneg %p226
        $region68: #{tpu_custom_call.1} parent=61 // pred_check_branch
          %229 = sbr.rel (%p227) target = $region70
        $region69: #{tpu_custom_call.1} parent=61 // pred_region
          %230 = vst [vmem:[%s219] sm:$0xff] 0.0
        $region70: #{tpu_custom_call.1} parent=61 // pred_fallthru
          _
        %v231 = vld [vmem:[%s224] sm:$0xff]
        %v232 = vld [vmem:[%s224 + $0x8] sm:$0xff]
        %v233 = vld [vmem:[%s224 + $0x10] sm:$0xff]
        %v234 = vld [vmem:[%s224 + $0x18] sm:$0xff]
        %v235 = vld [vmem:[%s224 + $0x20] sm:$0xff]
        %v236 = vld [vmem:[%s224 + $0x28] sm:$0xff]
        %v237 = vld [vmem:[%s224 + $0x30] sm:$0xff]
        %v238 = vld [vmem:[%s224 + $0x38] sm:$0xff]
        %v239 = vld [vmem:[%s224 + $0x40] sm:$0xff]
        %v240 = vld [vmem:[%s224 + $0x48] sm:$0xff]
        %v241 = vld [vmem:[%s224 + $0x50] sm:$0xff]
        %v242 = vld [vmem:[%s224 + $0x58] sm:$0xff]
        %v243 = vld [vmem:[%s224 + $0x60] sm:$0xff]
        %v244 = vld [vmem:[%s224 + $0x68] sm:$0xff]
        %v245 = vld [vmem:[%s224 + $0x70] sm:$0xff]
        %v246 = vld [vmem:[%s224 + $0x78] sm:$0xff]
        %v247 = vld [vmem:[%s196] sm:$0xff]
        %v248 = vld [vmem:[%s196 + $0x8] sm:$0xff]
        %v249 = vld [vmem:[%s196 + $0x10] sm:$0xff]
        %v250 = vld [vmem:[%s196 + $0x18] sm:$0xff]
        %v251 = vld [vmem:[%s196 + $0x20] sm:$0xff]
        %vm252 = vcmask 326656
        %v254 = vsel %vm252, %v231, 0
        %v257 = vsel %vm252, %v232, 0
        %v260 = vsel %vm252, %v233, 0
        %v263 = vsel %vm252, %v234, 0
        %v266 = vsel %vm252, %v235, 0
        %v269 = vsel %vm252, %v236, 0
        %v272 = vsel %vm252, %v237, 0
        %v275 = vsel %vm252, %v238, 0
        %v278 = vsel %vm252, %v239, 0
        %v281 = vsel %vm252, %v240, 0
        %v284 = vsel %vm252, %v241, 0
        %v287 = vsel %vm252, %v242, 0
        %v290 = vsel %vm252, %v243, 0
        %v293 = vsel %vm252, %v244, 0
        %v296 = vsel %vm252, %v245, 0
        %v299 = vsel %vm252, %v246, 0
        %301 = vmatprep.subr.mxu0 0.0
        %302 = vmatpush1.msra.mxu0 %v247
        %303 = vmatprep.subr.mxu0 0.0
        %304 = vmatpush1.msra.mxu0 %v248
        %305 = vmatprep.subr.mxu0 0.0
        %306 = vmatpush1.msra.mxu0 %v249
        %307 = vmatprep.subr.mxu0 0.0
        %308 = vmatpush1.msra.mxu0 %v250
        %309 = vmatprep.subr.mxu0 0.0
        %310 = vmatpush1.msra.mxu0 %v251
        %311 = vmatprep.subr.mxu0 0.0
        %312 = vmatpush1.msra.mxu0 0.0
        %313 = vmatprep.subr.mxu0 0.0
        %314 = vmatpush1.msra.mxu0 0.0
        %315 = vmatprep.subr.mxu0 0.0
        %316 = vmatpush1.msra.mxu0 0.0
        %317 = vmatprep.subr.mxu0 0.0
        %318 = vmatpush1.msra.mxu0 0.0
        %319 = vmatprep.subr.mxu0 0.0
        %320 = vmatpush1.msra.mxu0 0.0
        %321 = vmatprep.subr.mxu0 0.0
        %322 = vmatpush1.msra.mxu0 0.0
        %323 = vmatprep.subr.mxu0 0.0
        %324 = vmatpush1.msra.mxu0 0.0
        %325 = vmatprep.subr.mxu0 0.0
        %326 = vmatpush1.msra.mxu0 0.0
        %327 = vmatprep.subr.mxu0 0.0
        %328 = vmatpush1.msra.mxu0 0.0
        %329 = vmatprep.subr.mxu0 0.0
        %330 = vmatpush1.msra.mxu0 0.0
        %331 = vmatprep.subr.mxu0 0.0
        %332 = vmatpush1.msra.mxu0 0.0
        %333 = vmatprep.subr.mxu0 0.0
        %334 = vmatpush1.msra.mxu0 0.0
        %335 = vmatprep.subr.mxu0 0.0
        %336 = vmatpush1.msra.mxu0 0.0
        %337 = vmatprep.subr.mxu0 0.0
        %338 = vmatpush1.msra.mxu0 0.0
        %339 = vmatprep.subr.mxu0 0.0
        %340 = vmatpush1.msra.mxu0 0.0
        %341 = vmatprep.subr.mxu0 0.0
        %342 = vmatpush1.msra.mxu0 0.0
        %343 = vmatprep.subr.mxu0 0.0
        %344 = vmatpush1.msra.mxu0 0.0
        %345 = vmatprep.subr.mxu0 0.0
        %346 = vmatpush1.msra.mxu0 0.0
        %347 = vmatprep.subr.mxu0 0.0
        %348 = vmatpush1.msra.mxu0 0.0
        %349 = vmatprep.subr.mxu0 0.0
        %350 = vmatpush1.msra.mxu0 0.0
        %351 = vmatprep.subr.mxu0 0.0
        %352 = vmatpush1.msra.mxu0 0.0
        %353 = vmatprep.subr.mxu0 0.0
        %354 = vmatpush1.msra.mxu0 0.0
        %355 = vmatprep.subr.mxu0 0.0
        %356 = vmatpush1.msra.mxu0 0.0
        %357 = vmatprep.subr.mxu0 0.0
        %358 = vmatpush1.msra.mxu0 0.0
        %359 = vmatprep.subr.mxu0 0.0
        %360 = vmatpush1.msra.mxu0 0.0
        %361 = vmatprep.subr.mxu0 0.0
        %362 = vmatpush1.msra.mxu0 0.0
        %363 = vmatprep.subr.mxu0 0.0
        %364 = vmatpush1.msra.mxu0 0.0
        %365 = vmatprep.mubr.f32.mxu0 0.0
        %366 = vmatmul.mubr.f32.gmra.mrb[0].mxu0 %v254
        %v367 = vpop.f32.mrb[0].mxu0
        %v368 = vadd.f32 0.0, %v367
        %v369 = vpop.f32.mrb[0].mxu0
        %370 = vmatprep.mubr.f32.mxu0 0.0
        %371 = vmatmul.mubr.f32.gmra.mrb[0].mxu0 %v257
        %v372 = vpop.f32.mrb[0].mxu0
        %v373 = vadd.f32 0.0, %v372
        %v374 = vpop.f32.mrb[0].mxu0
        %375 = vmatprep.mubr.f32.mxu0 0.0
        %376 = vmatmul.mubr.f32.gmra.mrb[0].mxu0 %v260
        %v377 = vpop.f32.mrb[0].mxu0
        %v378 = vadd.f32 0.0, %v377
        %v379 = vpop.f32.mrb[0].mxu0
        %380 = vmatprep.mubr.f32.mxu0 0.0
        %381 = vmatmul.mubr.f32.gmra.mrb[0].mxu0 %v263
        %v382 = vpop.f32.mrb[0].mxu0
        %v383 = vadd.f32 0.0, %v382
        %v384 = vpop.f32.mrb[0].mxu0
        %385 = vmatprep.mubr.f32.mxu0 0.0
        %386 = vmatmul.mubr.f32.gmra.mrb[0].mxu0 %v266
        %v387 = vpop.f32.mrb[0].mxu0
        %v388 = vadd.f32 0.0, %v387
        %v389 = vpop.f32.mrb[0].mxu0
        %390 = vmatprep.mubr.f32.mxu0 0.0
        %391 = vmatmul.mubr.f32.gmra.mrb[0].mxu0 %v269
        %v392 = vpop.f32.mrb[0].mxu0
        %v393 = vadd.f32 0.0, %v392
        %v394 = vpop.f32.mrb[0].mxu0
        %395 = vmatprep.mubr.f32.mxu0 0.0
        %396 = vmatmul.mubr.f32.gmra.mrb[0].mxu0 %v272
        %v397 = vpop.f32.mrb[0].mxu0
        %v398 = vadd.f32 0.0, %v397
        %v399 = vpop.f32.mrb[0].mxu0
        %400 = vmatprep.mubr.f32.mxu0 0.0
        %401 = vmatmul.mubr.f32.gmra.mrb[0].mxu0 %v275
        %v402 = vpop.f32.mrb[0].mxu0
        %v403 = vadd.f32 0.0, %v402
        %v404 = vpop.f32.mrb[0].mxu0
        %405 = vmatprep.mubr.f32.mxu0 0.0
        %406 = vmatmul.mubr.f32.gmra.mrb[0].mxu0 %v278
        %v407 = vpop.f32.mrb[0].mxu0
        %v408 = vadd.f32 0.0, %v407
        %v409 = vpop.f32.mrb[0].mxu0
        %410 = vmatprep.mubr.f32.mxu0 0.0
        %411 = vmatmul.mubr.f32.gmra.mrb[0].mxu0 %v281
        %v412 = vpop.f32.mrb[0].mxu0
        %v413 = vadd.f32 0.0, %v412
        %v414 = vpop.f32.mrb[0].mxu0
        %415 = vmatprep.mubr.f32.mxu0 0.0
        %416 = vmatmul.mubr.f32.gmra.mrb[0].mxu0 %v284
        %v417 = vpop.f32.mrb[0].mxu0
        %v418 = vadd.f32 0.0, %v417
        %v419 = vpop.f32.mrb[0].mxu0
        %420 = vmatprep.mubr.f32.mxu0 0.0
        %421 = vmatmul.mubr.f32.gmra.mrb[0].mxu0 %v287
        %v422 = vpop.f32.mrb[0].mxu0
        %v423 = vadd.f32 0.0, %v422
        %v424 = vpop.f32.mrb[0].mxu0
        %425 = vmatprep.mubr.f32.mxu0 0.0
        %426 = vmatmul.mubr.f32.gmra.mrb[0].mxu0 %v290
        %v427 = vpop.f32.mrb[0].mxu0
        %v428 = vadd.f32 0.0, %v427
        %v429 = vpop.f32.mrb[0].mxu0
        %430 = vmatprep.mubr.f32.mxu0 0.0
        %431 = vmatmul.mubr.f32.gmra.mrb[0].mxu0 %v293
        %v432 = vpop.f32.mrb[0].mxu0
        %v433 = vadd.f32 0.0, %v432
        %v434 = vpop.f32.mrb[0].mxu0
        %435 = vmatprep.mubr.f32.mxu0 0.0
        %436 = vmatmul.mubr.f32.gmra.mrb[0].mxu0 %v296
        %v437 = vpop.f32.mrb[0].mxu0
        %v438 = vadd.f32 0.0, %v437
        %v439 = vpop.f32.mrb[0].mxu0
        %440 = vmatprep.mubr.f32.mxu0 0.0
        %441 = vmatmul.mubr.f32.gmra.mrb[0].mxu0 %v299
        %v442 = vpop.f32.mrb[0].mxu0
        %v443 = vadd.f32 0.0, %v442
        %v444 = vpop.f32.mrb[0].mxu0
        %445 = vdwg.mxu0
        %v446 = vmin.f32 %v368, 0.0
        %v447 = vmin.f32 %v373, 0.0
        %v448 = vmin.f32 %v378, 0.0
        %v449 = vmin.f32 %v383, 0.0
        %v450 = vmin.f32 %v388, 0.0
        %v451 = vmin.f32 %v393, 0.0
        %v452 = vmin.f32 %v398, 0.0
        %v453 = vmin.f32 %v403, 0.0
        %v454 = vmin.f32 %v408, 0.0
        %v455 = vmin.f32 %v413, 0.0
        %v456 = vmin.f32 %v418, 0.0
        %v457 = vmin.f32 %v423, 0.0
        %v458 = vmin.f32 %v428, 0.0
        %v459 = vmin.f32 %v433, 0.0
        %v460 = vmin.f32 %v438, 0.0
        %v461 = vmin.f32 %v443, 0.0
        %v462 = vmul.f32 %v446, 1.442695
        %v463 = vpow.pop %v462
        %v464 = vmul.f32 %v447, 1.442695
        %v465 = vpow.pop %v464
        %v466 = vmul.f32 %v448, 1.442695
        %v467 = vpow.pop %v466
        %v468 = vmul.f32 %v449, 1.442695
        %v469 = vpow.pop %v468
        %v470 = vmul.f32 %v450, 1.442695
        %v471 = vpow.pop %v470
        %v472 = vmul.f32 %v451, 1.442695
        %v473 = vpow.pop %v472
        %v474 = vmul.f32 %v452, 1.442695
        %v475 = vpow.pop %v474
        %v476 = vmul.f32 %v453, 1.442695
        %v477 = vpow.pop %v476
        %v478 = vmul.f32 %v454, 1.442695
        %v479 = vpow.pop %v478
        %v480 = vmul.f32 %v455, 1.442695
        %v481 = vpow.pop %v480
        %v482 = vmul.f32 %v456, 1.442695
        %v483 = vpow.pop %v482
        %v484 = vmul.f32 %v457, 1.442695
        %v485 = vpow.pop %v484
        %v486 = vmul.f32 %v458, 1.442695
        %v487 = vpow.pop %v486
        %v488 = vmul.f32 %v459, 1.442695
        %v489 = vpow.pop %v488
        %v490 = vmul.f32 %v460, 1.442695
        %v491 = vpow.pop %v490
        %v492 = vmul.f32 %v461, 1.442695
        %v493 = vpow.pop %v492
        %v494 = vmul.f32 %v463, %v463
        %v495 = vmul.f32 %v465, %v465
        %v496 = vmul.f32 %v467, %v467
        %v497 = vmul.f32 %v469, %v469
        %v498 = vmul.f32 %v471, %v471
        %v499 = vmul.f32 %v473, %v473
        %v500 = vmul.f32 %v475, %v475
        %v501 = vmul.f32 %v477, %v477
        %v502 = vmul.f32 %v479, %v479
        %v503 = vmul.f32 %v481, %v481
        %v504 = vmul.f32 %v483, %v483
        %v505 = vmul.f32 %v485, %v485
        %v506 = vmul.f32 %v487, %v487
        %v507 = vmul.f32 %v489, %v489
        %v508 = vmul.f32 %v491, %v491
        %v509 = vmul.f32 %v493, %v493
        %v510 = vadd.f32 %v463, %v494
        %v511 = vadd.f32 %v465, %v495
        %v512 = vadd.f32 %v467, %v496
        %v513 = vadd.f32 %v469, %v497
        %v514 = vadd.f32 %v471, %v498
        %v515 = vadd.f32 %v473, %v499
        %v516 = vadd.f32 %v475, %v500
        %v517 = vadd.f32 %v477, %v501
        %v518 = vadd.f32 %v479, %v502
        %v519 = vadd.f32 %v481, %v503
        %v520 = vadd.f32 %v483, %v504
        %v521 = vadd.f32 %v485, %v505
        %v522 = vadd.f32 %v487, %v506
        %v523 = vadd.f32 %v489, %v507
        %v524 = vadd.f32 %v491, %v508
        %v525 = vadd.f32 %v493, %v509
        %v526 = vmul.f32 %v494, %v494
        %v527 = vmul.f32 %v495, %v495
        %v528 = vmul.f32 %v496, %v496
        %v529 = vmul.f32 %v497, %v497
        %v530 = vmul.f32 %v498, %v498
        %v531 = vmul.f32 %v499, %v499
        %v532 = vmul.f32 %v500, %v500
        %v533 = vmul.f32 %v501, %v501
        %v534 = vmul.f32 %v502, %v502
        %v535 = vmul.f32 %v503, %v503
        %v536 = vmul.f32 %v504, %v504
        %v537 = vmul.f32 %v505, %v505
        %v538 = vmul.f32 %v506, %v506
        %v539 = vmul.f32 %v507, %v507
        %v540 = vmul.f32 %v508, %v508
        %v541 = vmul.f32 %v509, %v509
        %v542 = vadd.f32 %v510, %v526
        %v543 = vadd.f32 %v511, %v527
        %v544 = vadd.f32 %v512, %v528
        %v545 = vadd.f32 %v513, %v529
        %v546 = vadd.f32 %v514, %v530
        %v547 = vadd.f32 %v515, %v531
        %v548 = vadd.f32 %v516, %v532
        %v549 = vadd.f32 %v517, %v533
        %v550 = vadd.f32 %v518, %v534
        %v551 = vadd.f32 %v519, %v535
        %v552 = vadd.f32 %v520, %v536
        %v553 = vadd.f32 %v521, %v537
        %v554 = vadd.f32 %v522, %v538
        %v555 = vadd.f32 %v523, %v539
        %v556 = vadd.f32 %v524, %v540
        %v557 = vadd.f32 %v525, %v541
        %v558 = vmul.f32 %v526, %v526
        %v559 = vmul.f32 %v527, %v527
        %v560 = vmul.f32 %v528, %v528
        %v561 = vmul.f32 %v529, %v529
        %v562 = vmul.f32 %v530, %v530
        %v563 = vmul.f32 %v531, %v531
        %v564 = vmul.f32 %v532, %v532
        %v565 = vmul.f32 %v533, %v533
        %v566 = vmul.f32 %v534, %v534
        %v567 = vmul.f32 %v535, %v535
        %v568 = vmul.f32 %v536, %v536
        %v569 = vmul.f32 %v537, %v537
        %v570 = vmul.f32 %v538, %v538
        %v571 = vmul.f32 %v539, %v539
        %v572 = vmul.f32 %v540, %v540
        %v573 = vmul.f32 %v541, %v541
        %v574 = vadd.f32 %v542, %v558
        %v575 = vadd.f32 %v543, %v559
        %v576 = vadd.f32 %v544, %v560
        %v577 = vadd.f32 %v545, %v561
        %v578 = vadd.f32 %v546, %v562
        %v579 = vadd.f32 %v547, %v563
        %v580 = vadd.f32 %v548, %v564
        %v581 = vadd.f32 %v549, %v565
        %v582 = vadd.f32 %v550, %v566
        %v583 = vadd.f32 %v551, %v567
        %v584 = vadd.f32 %v552, %v568
        %v585 = vadd.f32 %v553, %v569
        %v586 = vadd.f32 %v554, %v570
        %v587 = vadd.f32 %v555, %v571
        %v588 = vadd.f32 %v556, %v572
        %v589 = vadd.f32 %v557, %v573
        %p590 = scmp.lt.s32.totalorder %s20, 1
        %p591 = scmp.lt.s32.totalorder %s21, 1
        %p592 = pneg %p590
        %p593 = pneg %p591
        %p594 = pnand %p590, %p593
        %p595 = pneg %p594
        %p596 = pnand %p592, %p591
        %p597 = pneg %p596
        %p598 = por %p595, %p597
        %s599 = scalar_select %p598, -1.0, 1.0
        %v600 = vadd.f32 %v574, %v575
        %v601 = vadd.f32 %v600, %v576
        %v602 = vadd.f32 %v601, %v577
        %v603 = vadd.f32 %v602, %v578
        %v604 = vadd.f32 %v603, %v579
        %v605 = vadd.f32 %v604, %v580
        %v606 = vadd.f32 %v605, %v581
        %v607 = vadd.f32 %v606, %v582
        %v608 = vadd.f32 %v607, %v583
        %v609 = vadd.f32 %v608, %v584
        %v610 = vadd.f32 %v609, %v585
        %v611 = vadd.f32 %v610, %v586
        %v612 = vadd.f32 %v611, %v587
        %v613 = vadd.f32 %v612, %v588
        %v614 = vadd.f32 %v613, %v589
        %v615 = vld [vmem:[%s219] sm:$0xff]
        %v616 = vstv %s599
        %v617 = vmul.f32 %v616, %v614
        %v618 = vadd.f32 %v615, %v617
        %619 = vst [vmem:[%s219] sm:$0xff] %v618
        %s620 = sand.u32 %s88, 1
        %s621 = scalar_lea.sflag [#allocation4], %s620
        %s622 = sand.u32 %s88, 1
        %s623 = smul.addr %s622, 8
        %s624 = scalar_lea.vmem [#allocation3], %s623
        // Predicated region
        $region71: #{tpu_custom_call.1} parent=61 // pred_check
          %p625 = pneg %p98
        $region72: #{tpu_custom_call.1} parent=61 // pred_check_branch
          %627 = sbr.rel (%p625) target = $region74
        $region73: #{tpu_custom_call.1} parent=61 // pred_region
          %s629 = ssub.s32 128, 128
          %630 = vsyncadd %s621, %s629
          %s631 = smul.addr %s20, 128
          %s632 = scalar_lea.hbm %s2, %s631
          %s634 = sshll.u32 %s624, 4
          %s635 = int_to_ptr.vmem [resolvable:$true] %s634
          %637 = dma.vmem_to_hbm [thread:$0]  %s635, 128, %s632, %s621
        $region74: #{tpu_custom_call.1} parent=61 // pred_fallthru
          _
      $region62: #{tpu_custom_call.1} parent=5 // pred_fallthru
        _
      %p638 = scmp.le.s32.totalorder 2, %s11
      // Predicated region
      $region75: #{tpu_custom_call.1} parent=5 // pred_check
        %p639 = pneg %p638
      $region76: #{tpu_custom_call.1} parent=5 // pred_check_branch
        %641 = sbr.rel (%p639) target = $region78
      $region77: #{tpu_custom_call.1} parent=5 // pred_region
        %s642 = ssub.s32 %s11, 2
        // Predicated region
        $region79: #{tpu_custom_call.1} parent=77 // pred_check
          %p643 = pneg %p104
        $region80: #{tpu_custom_call.1} parent=77 // pred_check_branch
          %645 = sbr.rel (%p643) target = $region82
        $region81: #{tpu_custom_call.1} parent=77 // pred_region
          %s646 = sand.u32 %s89, 1
          %s647 = scalar_lea.sflag [#allocation4], %s646
          %s648 = sand.u32 %s89, 1
          %s649 = smul.addr %s648, 8
          %s650 = scalar_lea.vmem [#allocation3], %s649
          %651 = dma.done %s647, 128
        $region82: #{tpu_custom_call.1} parent=77 // pred_fallthru
          _
      $region78: #{tpu_custom_call.1} parent=5 // pred_fallthru
        _
    $region6: #{tpu_custom_call.1} parent=1 // loop_footer
      %s15 = sadd.s32 1, %s11
    $region7: #{tpu_custom_call.1} parent=1 // loop_footer_branch
      %10 = sbr.rel target = $region3
    $region8: #{tpu_custom_call.1} parent=1 // loop_exit
      _
    %652 = vsyncpa [#allocation4], 1
    %s653 = scalar_lea.sflag [#allocation4], 1
    %654 = vsyncpa %s653, 1

</llo_original>
